<compile_context>
chip_gen: v5e
topology: v5e:2x2
jax: 0.10.0
libtpu: 0.0.40
codegen_flags: <defaults>
</compile_context>

<pallas_src>
import functools

import jax
import jax.numpy as jnp
from jax.experimental import pallas as pl
from jax.experimental.pallas import tpu as pltpu

_SUBLANES = 8  # f32 sublane granularity for the batch tile


def mlp_kernel(x_ref, w1_ref, b1_ref, w2_ref, b2_ref, o_ref):
    # fc1: bf16 activation tile, tiny f32 VMEM-resident weights, f32 accumulate.
    x = x_ref[...].astype(jnp.float32)
    h = jnp.dot(x, w1_ref[...], preferred_element_type=jnp.float32) + b1_ref[...]
    # softmax over dim=1 (feature axis of the 2-D activation), numerically stable
    m = jnp.max(h, axis=-1, keepdims=True)
    e = jnp.exp(h - m)
    denom = jnp.sum(e, axis=-1, keepdims=True)
    p = e * pl.reciprocal(denom, approx=True)   # EUP slot, VALU stays free
    # dropout p=0.5: identity at inference (eval mode)
    out = jnp.dot(p, w2_ref[...], preferred_element_type=jnp.float32) + b2_ref[...]
    o_ref[...] = out.astype(o_ref.dtype)


def _pick_batch_tile(batch, block_b):
    """Pick (tb, b_pad).  tb is a multiple of 8 (or == batch when batch < 8);
    prefer a tb that divides batch exactly so no padded x copy is materialized."""
    if batch <= _SUBLANES:
        return batch, batch                       # block == full dim: legal
    tb = min(int(block_b), (batch // _SUBLANES) * _SUBLANES)
    tb = max(_SUBLANES, (tb // _SUBLANES) * _SUBLANES)
    # search downward (but not below tb/2) for an exact divisor -> no padding
    t = tb
    while t >= max(_SUBLANES, tb // 2):
        if batch % t == 0:
            return t, batch
        t -= _SUBLANES
    b_pad = pl.cdiv(batch, tb) * tb               # ragged tail: fall back to pad
    return tb, b_pad


@functools.partial(jax.jit, static_argnames=("block_b",))
def neural_net_forward(x, w1, b1, w2, b2, *, block_b=1024):
    """x: (B, in), w1: (in, hidden), b1: (1, hidden), w2: (hidden, C), b2: (1, C)."""
    B, in_dim = x.shape
    hidden = w1.shape[1]
    num_classes = w2.shape[1]

    tb, b_pad = _pick_batch_tile(B, block_b)
    num_tiles = b_pad // tb

    # bf16 activation stream: halves the dominant HBM read; accumulation in f32.
    x_bf16 = x.astype(jnp.bfloat16)
    if b_pad != B:
        # Only materialize a padded copy when tb does not divide B.
        # TODO(synk): in-kernel tail masking would avoid even this copy.
        x_bf16 = jnp.zeros((b_pad, in_dim), jnp.bfloat16).at[:B, :].set(x_bf16)

    # Triple-buffer the activation stream only when there is latency to hide.
    if num_tiles >= 3:
        x_spec = pl.BlockSpec((tb, in_dim), lambda i: (i, 0),
                              pipeline_mode=pl.Buffered(3))
        n_x_bufs = 3
    else:
        x_spec = pl.BlockSpec((tb, in_dim), lambda i: (i, 0))
        n_x_bufs = 2

    # Raise scoped VMEM only if a very large block_b needs it (v5e default 16 MiB
    # is the tightest across v5e/v6e/v7x; resident weights are only ~10 KB).
    weight_bytes = 4 * (w1.size + b1.size + w2.size + b2.size)
    vmem_need = (n_x_bufs * tb * in_dim * 2          # bf16 activation buffers
                 + 2 * tb * num_classes * 4          # f32 output buffers
                 + weight_bytes)
    vmem_limit = None
    if vmem_need > 12 * 1024 * 1024:
        vmem_limit = min(2 * vmem_need, 48 * 1024 * 1024)

    cost = pl.CostEstimate(
        flops=2 * b_pad * hidden * (in_dim + num_classes),
        transcendentals=b_pad * hidden,
        bytes_accessed=(2 * b_pad * in_dim            # bf16 x read
                        + 4 * b_pad * num_classes     # f32 out write (unpadded)
                        + weight_bytes),
    )

    out = pl.pallas_call(
        mlp_kernel,
        out_shape=jax.ShapeDtypeStruct((b_pad, num_classes), jnp.float32),
        grid=(num_tiles,),
        in_specs=[
            # activations stream, one (tb, in) tile per grid step
            x_spec,
            # weights / biases: constant index_map -> DMA'd once, VMEM-resident
            pl.BlockSpec((in_dim, hidden), lambda i: (0, 0)),
            pl.BlockSpec((1, hidden), lambda i: (0, 0)),
            pl.BlockSpec((hidden, num_classes), lambda i: (0, 0)),
            pl.BlockSpec((1, num_classes), lambda i: (0, 0)),
        ],
        # last dim == full array dim (num_classes) -> legal, no 128-lane padding
        out_specs=pl.BlockSpec((tb, num_classes), lambda i: (i, 0)),
        compiler_params=pltpu.CompilerParams(
            dimension_semantics=("parallel",),
            vmem_limit_bytes=vmem_limit,
        ),
        cost_estimate=cost,
    )(x_bf16, w1, b1, w2, b2)

    return out if b_pad == B else out[:B]


def init_linear_params(key, fan_in, fan_out):
    # Mimics torch.nn.Linear default init: U(-1/sqrt(fan_in), 1/sqrt(fan_in)).
    kw, kb = jax.random.split(key)
    bound = 1.0 / jnp.sqrt(jnp.float32(fan_in))
    w = jax.random.uniform(kw, (fan_in, fan_out), jnp.float32, -bound, bound)
    b = jax.random.uniform(kb, (1, fan_out), jnp.float32, -bound, bound)
    return w, b


if __name__ == "__main__":
    batch = 8
    input_size = 64
    hidden_size = 32
    num_classes = 4

    key = jax.random.PRNGKey(0)
    kx, k1, k2 = jax.random.split(key, 3)

    x = jax.random.normal(kx, (batch, input_size), jnp.float32)
    w1, b1 = init_linear_params(k1, input_size, hidden_size)
    w2, b2 = init_linear_params(k2, hidden_size, num_classes)

    out = neural_net_forward(x, w1, b1, w2, b2)
    jax.block_until_ready(out)

    # Reference check in plain JAX (fc1 -> softmax(axis=1) -> fc2; dropout=eval identity)
    h_ref = x @ w1 + b1
    p_ref = jax.nn.softmax(h_ref, axis=1)
    out_ref = p_ref @ w2 + b2
    assert out.shape == (batch, num_classes)
    # bf16 activation stream + approx reciprocal -> loosened tolerance
    assert jnp.allclose(out, out_ref, atol=1e-2, rtol=1e-2), (
        float(jnp.max(jnp.abs(out - out_ref))))

    print("KERNEL_OK")
</pallas_src>

<mosaic_0001>
module attributes {stable_mosaic.version = 11 : i64} {
  func.func @mlp_kernel(%arg0: i32, %arg1: memref<8x64xbf16, #tpu.memory_space<vmem>>, %arg2: memref<64x32xf32, #tpu.memory_space<vmem>>, %arg3: memref<1x32xf32, #tpu.memory_space<vmem>>, %arg4: memref<32x4xf32, #tpu.memory_space<vmem>>, %arg5: memref<1x4xf32, #tpu.memory_space<vmem>>, %arg6: memref<8x4xf32, #tpu.memory_space<vmem>>) attributes {dimension_semantics = [#tpu.dimension_semantics<parallel>], iteration_bounds = array<i64: 1>, scalar_prefetch = 0 : i64, scratch_operands = 0 : i64, tpu.core_type = #tpu.core_type<tc>, window_params = [{transform_indices = @transform_0, window_bounds = array<i64: 8, 64>}, {pipeline_mode = #tpu.pipeline_mode<synchronous>, transform_indices = @transform_1, window_bounds = array<i64: 64, 32>}, {pipeline_mode = #tpu.pipeline_mode<synchronous>, transform_indices = @transform_2, window_bounds = array<i64: 1, 32>}, {pipeline_mode = #tpu.pipeline_mode<synchronous>, transform_indices = @transform_3, window_bounds = array<i64: 32, 4>}, {pipeline_mode = #tpu.pipeline_mode<synchronous>, transform_indices = @transform_4, window_bounds = array<i64: 1, 4>}, {transform_indices = @transform_5, window_bounds = array<i64: 8, 4>}]} {
    %c0 = arith.constant 0 : index
    %c0_0 = arith.constant 0 : index
    %0 = vector.load %arg1[%c0, %c0_0] : memref<8x64xbf16, #tpu.memory_space<vmem>>, vector<8x64xbf16>
    %1 = arith.extf %0 : vector<8x64xbf16> to vector<8x64xf32>
    %c0_1 = arith.constant 0 : index
    %c0_2 = arith.constant 0 : index
    %2 = vector.load %arg2[%c0_1, %c0_2] : memref<64x32xf32, #tpu.memory_space<vmem>>, vector<64x32xf32>
    %cst = arith.constant dense<0.000000e+00> : vector<8x32xf32>
    %3 = tpu.matmul %1, %2, %cst {dimension_numbers = #tpu.dot_dimension_numbers<[1], [0], [0], [1], [0, 0, 1, 1], [], []>} : vector<8x64xf32>, vector<64x32xf32>, vector<8x32xf32> -> vector<8x32xf32>
    %c0_3 = arith.constant 0 : index
    %c0_4 = arith.constant 0 : index
    %4 = vector.load %arg3[%c0_3, %c0_4] : memref<1x32xf32, #tpu.memory_space<vmem>>, vector<1x32xf32>
    %5 = vector.broadcast %4 : vector<1x32xf32> to vector<8x32xf32>
    %6 = arith.addf %3, %5 : vector<8x32xf32>
    %cst_5 = arith.constant dense<0xFF800000> : vector<8xf32>
    %7 = vector.multi_reduction <maximumf>, %6, %cst_5 [1] : vector<8x32xf32> to vector<8xf32>
    %8 = vector.shape_cast %7 : vector<8xf32> to vector<8x1xf32>
    %9 = vector.broadcast %8 : vector<8x1xf32> to vector<8x32xf32>
    %10 = arith.subf %6, %9 : vector<8x32xf32>
    %11 = math.exp %10 : vector<8x32xf32>
    %cst_6 = arith.constant dense<0.000000e+00> : vector<8xf32>
    %12 = vector.multi_reduction <add>, %11, %cst_6 [1] : vector<8x32xf32> to vector<8xf32>
    %13 = vector.shape_cast %12 : vector<8xf32> to vector<8x1xf32>
    %14 = tpu.reciprocal %13 {approx = true} : vector<8x1xf32> -> vector<8x1xf32>
    %15 = vector.broadcast %14 : vector<8x1xf32> to vector<8x32xf32>
    %16 = arith.mulf %11, %15 : vector<8x32xf32>
    %c0_7 = arith.constant 0 : index
    %c0_8 = arith.constant 0 : index
    %17 = vector.load %arg4[%c0_7, %c0_8] : memref<32x4xf32, #tpu.memory_space<vmem>>, vector<32x4xf32>
    %cst_9 = arith.constant dense<0.000000e+00> : vector<8x4xf32>
    %18 = tpu.matmul %16, %17, %cst_9 {dimension_numbers = #tpu.dot_dimension_numbers<[1], [0], [0], [1], [0, 0, 1, 1], [], []>} : vector<8x32xf32>, vector<32x4xf32>, vector<8x4xf32> -> vector<8x4xf32>
    %c0_10 = arith.constant 0 : index
    %c0_11 = arith.constant 0 : index
    %19 = vector.load %arg5[%c0_10, %c0_11] : memref<1x4xf32, #tpu.memory_space<vmem>>, vector<1x4xf32>
    %20 = vector.broadcast %19 : vector<1x4xf32> to vector<8x4xf32>
    %21 = arith.addf %18, %20 : vector<8x4xf32>
    %c0_12 = arith.constant 0 : index
    %c0_13 = arith.constant 0 : index
    %22 = vector.load %arg6[%c0_12, %c0_13] : memref<8x4xf32, #tpu.memory_space<vmem>>, vector<8x4xf32>
    tpu.vector_store %arg6[%c0_12, %c0_13], %21 {strides = array<i32>} : memref<8x4xf32, #tpu.memory_space<vmem>>, vector<8x4xf32>,
    return
  }
  func.func @transform_0(%arg0: i32) -> (i32, i32) {
    %c0_i32 = arith.constant 0 : i32
    %c0_i32_0 = arith.constant 0 : i32
    return %arg0, %c0_i32 : i32, i32
  }
  func.func @transform_1(%arg0: i32) -> (i32, i32) {
    %c0_i32 = arith.constant 0 : i32
    %c0_i32_0 = arith.constant 0 : i32
    %c0_i32_1 = arith.constant 0 : i32
    return %c0_i32, %c0_i32_0 : i32, i32
  }
  func.func @transform_2(%arg0: i32) -> (i32, i32) {
    %c0_i32 = arith.constant 0 : i32
    %c0_i32_0 = arith.constant 0 : i32
    %c0_i32_1 = arith.constant 0 : i32
    return %c0_i32, %c0_i32_0 : i32, i32
  }
  func.func @transform_3(%arg0: i32) -> (i32, i32) {
    %c0_i32 = arith.constant 0 : i32
    %c0_i32_0 = arith.constant 0 : i32
    %c0_i32_1 = arith.constant 0 : i32
    return %c0_i32, %c0_i32_0 : i32, i32
  }
  func.func @transform_4(%arg0: i32) -> (i32, i32) {
    %c0_i32 = arith.constant 0 : i32
    %c0_i32_0 = arith.constant 0 : i32
    %c0_i32_1 = arith.constant 0 : i32
    return %c0_i32, %c0_i32_0 : i32, i32
  }
  func.func @transform_5(%arg0: i32) -> (i32, i32) {
    %c0_i32 = arith.constant 0 : i32
    %c0_i32_0 = arith.constant 0 : i32
    return %arg0, %c0_i32 : i32, i32
  }
}

</mosaic_0001>

<llo_original>
// kernel: neural_net_forward.1
$region0: #{neural_net_forward.1}
  #allocation0 [shape = 'u32[]', space=smem, size = 0x4, offset = 0x4, fixed_abs, tag = 'smem constant byte address 0x4 - core index']
  #allocation1 [shape = 'u32[72,128]{1,0:T(1,128)}', space=vmem, size = 0x9000, scoped, tag = 'internal scratch']
  %s0 = inlined_call_operand.vmem [shape: bf16[8,64], index: 0, kind: input, shape index: {}]
  %s1 = inlined_call_operand.vmem [shape: f32[64,32], index: 1, kind: input, shape index: {}]
  %s2 = inlined_call_operand.vmem [shape: f32[1,32], index: 2, kind: input, shape index: {}]
  %s3 = inlined_call_operand.vmem [shape: f32[32,4], index: 3, kind: input, shape index: {}]
  %s4 = inlined_call_operand.vmem [shape: f32[1,4], index: 4, kind: input, shape index: {}]
  %s5 = inlined_call_operand.vmem [shape: f32[8,4], index: 5, kind: output, shape index: {}]
  %s6 = sld [smem:[#allocation0]]
  $region30: #{neural_net_forward.1} parent=0
    _
  %s8 = ssub.s32 1, %s6
  %s9 = scalar_select 0, %s8, %s6
  // Predicated region
  $region2: #{neural_net_forward.1} parent=0 // pred_check
    _
  $region3: #{neural_net_forward.1} parent=0 // pred_check_branch
    %11 = sbr.rel (0) target = $region5
  $region4: #{neural_net_forward.1} parent=0 // pred_region
    _
  $region5: #{neural_net_forward.1} parent=0 // pred_fallthru
    _
  // Predicated region
  $region6: #{neural_net_forward.1} parent=0 // pred_check
    _
  $region7: #{neural_net_forward.1} parent=0 // pred_check_branch
    %13 = sbr.rel (0) target = $region9
  $region8: #{neural_net_forward.1} parent=0 // pred_region
    _
  $region9: #{neural_net_forward.1} parent=0 // pred_fallthru
    _
  // Predicated region
  $region10: #{neural_net_forward.1} parent=0 // pred_check
    _
  $region11: #{neural_net_forward.1} parent=0 // pred_check_branch
    %15 = sbr.rel (0) target = $region13
  $region12: #{neural_net_forward.1} parent=0 // pred_region
    _
  $region13: #{neural_net_forward.1} parent=0 // pred_fallthru
    _
  // Predicated region
  $region14: #{neural_net_forward.1} parent=0 // pred_check
    _
  $region15: #{neural_net_forward.1} parent=0 // pred_check_branch
    %17 = sbr.rel (0) target = $region17
  $region16: #{neural_net_forward.1} parent=0 // pred_region
    _
  $region17: #{neural_net_forward.1} parent=0 // pred_fallthru
    _
  // Predicated region
  $region18: #{neural_net_forward.1} parent=0 // pred_check
    _
  $region19: #{neural_net_forward.1} parent=0 // pred_check_branch
    %19 = sbr.rel (0) target = $region21
  $region20: #{neural_net_forward.1} parent=0 // pred_region
    _
  $region21: #{neural_net_forward.1} parent=0 // pred_fallthru
    _
  %v20 = vld [vmem:[%s0] sm:$0xf]
  %v21 = vunpack.c.l.bf16 %v20
  %v22 = vld [vmem:[%s1] sm:$0xff]
  %v23 = vld [vmem:[%s1 + $0x8] sm:$0xff]
  %v24 = vld [vmem:[%s1 + $0x10] sm:$0xff]
  %v25 = vld [vmem:[%s1 + $0x18] sm:$0xff]
  %v26 = vld [vmem:[%s1 + $0x20] sm:$0xff]
  %v27 = vld [vmem:[%s1 + $0x28] sm:$0xff]
  %v28 = vld [vmem:[%s1 + $0x30] sm:$0xff]
  %v29 = vld [vmem:[%s1 + $0x38] sm:$0xff]
  %v30 = vld [vmem:[%s2] sm:$0x1]
  %v32 = vperm.slane %v30, 0
  %vm34 = vcmask 523264
  %v36 = vsel %vm34, %v21, 0
  %38 = vmatpush.msra.mxu0 0.0
  %39 = vmatpush.msra.mxu0 0.0
  %40 = vmatpush.msra.mxu0 0.0
  %41 = vmatpush.msra.mxu0 0.0
  %42 = vmatpush.msra.mxu0 0.0
  %43 = vmatpush.msra.mxu0 0.0
  %44 = vmatpush.msra.mxu0 0.0
  %45 = vmatpush.msra.mxu0 0.0
  %46 = vmatpush.msra.mxu0 %v29
  %47 = vmatpush.msra.mxu0 %v28
  %48 = vmatpush.msra.mxu0 %v27
  %49 = vmatpush.msra.mxu0 %v26
  %50 = vmatpush.msra.mxu0 %v25
  %51 = vmatpush.msra.mxu0 %v24
  %52 = vmatpush.msra.mxu0 %v23
  %53 = vmatpush.msra.mxu0 %v22
  %54 = vmatmul.f32.gmra.mxu0 %v36
  %v55 = vpop.f32.mrf.mxu0
  %v56 = vadd.f32 %v32, %v55
  %57 = vdwg.mxu0
  %vm58 = vcmask 261120
  %v59 = vsel %vm58, %v56, -inf
  %60 = vmax.xlane.f32.xlu0 %v59
  %v61 = vpop.xlane.xlu0 %60
  %v62 = vsub.f32 %v56, %v61
  %v63 = vmul.f32 %v62, 1.442695
  %v64 = vpow.pop %v63
  %v65 = vsel %vm58, %v64, 0.0
  %66 = vadd.xlane.f32.xlu0 %v65
  %v67 = vpop.xlane.xlu0 %66
  %v68 = vrcp.pop %v67
  %v69 = vmul.f32 %v64, %v68
  %v70 = vld [vmem:[%s3] sm:$0xff]
  %v71 = vld [vmem:[%s3 + $0x8] sm:$0xff]
  %v72 = vld [vmem:[%s3 + $0x10] sm:$0xff]
  %v73 = vld [vmem:[%s3 + $0x18] sm:$0xff]
  %v74 = vld [vmem:[%s4] sm:$0x1]
  %v76 = vperm.slane %v74, 0
  %v79 = vsel %vm58, %v69, 0
  %81 = vmatpush.msra.mxu0 0.0
  %82 = vmatpush.msra.mxu0 0.0
  %83 = vmatpush.msra.mxu0 0.0
  %84 = vmatpush.msra.mxu0 0.0
  %85 = vmatpush.msra.mxu0 0.0
  %86 = vmatpush.msra.mxu0 0.0
  %87 = vmatpush.msra.mxu0 0.0
  %88 = vmatpush.msra.mxu0 0.0
  %89 = vmatpush.msra.mxu0 0.0
  %90 = vmatpush.msra.mxu0 0.0
  %91 = vmatpush.msra.mxu0 0.0
  %92 = vmatpush.msra.mxu0 0.0
  %93 = vmatpush.msra.mxu0 %v73
  %94 = vmatpush.msra.mxu0 %v72
  %95 = vmatpush.msra.mxu0 %v71
  %96 = vmatpush.msra.mxu0 %v70
  %97 = vmatmul.f32.gmra.mxu0 %v79
  %v98 = vpop.f32.mrf.mxu0
  %v99 = vadd.f32 %v76, %v98
  %100 = vdwg.mxu0
  %vm101 = vcmask 31744
  %102 = vst.msk [vmem:[%s5] sm:$0xff] %vm101, %v99
  // Predicated region
  $region22: #{neural_net_forward.1} parent=0 // pred_check
    _
  $region23: #{neural_net_forward.1} parent=0 // pred_check_branch
    %104 = sbr.rel (0) target = $region25
  $region24: #{neural_net_forward.1} parent=0 // pred_region
    _
  $region25: #{neural_net_forward.1} parent=0 // pred_fallthru
    _
  // Predicated region
  $region26: #{neural_net_forward.1} parent=0 // pred_check
    _
  $region27: #{neural_net_forward.1} parent=0 // pred_check_branch
    %106 = sbr.rel (0) target = $region29
  $region28: #{neural_net_forward.1} parent=0 // pred_region
    _
  $region29: #{neural_net_forward.1} parent=0 // pred_fallthru
    _

</llo_original>
